<compile_context>
chip_gen: v7x
topology: tpu7x:2x2x1
jax: 0.10.0
libtpu: 0.0.40
codegen_flags: <defaults>
</compile_context>

<pallas_src>
import functools

import jax
import jax.numpy as jnp
from jax import lax
from jax.experimental import pallas as pl
from jax.experimental.pallas import tpu as pltpu

COUT_SLOT = 16  # per-pixel output slot width: 11 real channels + 5 zero lanes


def _round_up(x, m):
    return (x + m - 1) // m * m


def _conv_rows_kernel(x_ref, a_ref, b_ref, o_ref, *, n_kh, th):
    """One (batch, row-block) step of the 5x5 'same' conv.

    x_ref: (R_pad, Kin)      padded image rows for this batch element (resident)
    a_ref: (KH, Kin, Nout)   block-Toeplitz weights (resident), Kin=(W+4)*Cin
    b_ref: (1, Nout)         packed bias (resident), Nout = W*COUT_SLOT
    o_ref: (TH, Nout)        packed output rows (W pixels x COUT_SLOT lanes)
    """
    i = pl.program_id(1)
    row0 = pl.multiple_of(i * th, 8)            # 8-aligned slab start
    slab = x_ref[pl.ds(row0, th + 8), :]        # (TH+8, Kin) aligned load

    # kh taps are sublane-shifted static slices of the slab; kw/Cin taps are
    # folded into the Toeplitz weight, so each tap is one dense MXU matmul.
    acc = jnp.dot(slab[0:th, :], a_ref[0], preferred_element_type=jnp.float32)
    for t in range(1, n_kh):
        acc = acc + jnp.dot(slab[t:t + th, :], a_ref[t],
                            preferred_element_type=jnp.float32)
    o_ref[...] = (acc + b_ref[...]).astype(o_ref.dtype)


def prepare_conv_params(weight_oihw, bias, width, *, padding=2,
                        cout_slot=COUT_SLOT, compute_dtype=jnp.float32):
    """One-time parameter prep (hoisted out of the hot path).

    Builds A with  A[kh, (x+kw)*Cin + c, x*cout_slot + co] = weight[co, c, kh, kw]
    so that  out[y, x*slot + co] = sum_kh x_flat[y+kh, :] @ A[kh]  performs the
    full KH*KW*Cin contraction with no in-kernel im2col, and the output comes
    out pre-packed as W pixels x cout_slot lanes per row.
    """
    cout, cin, kh, kw = weight_oihw.shape
    assert kw == 2 * padding + 1, "built for 'same' conv (stride 1)"
    kin = (width + 2 * padding) * cin
    nout = width * cout_slot

    # (Cout, Cin, KH, KW) -> (KH, KW*Cin, Cout), row order [kw, c].
    w_t = jnp.transpose(weight_oihw, (2, 3, 1, 0)).reshape(kh, kw * cin, cout)
    a = jnp.zeros((kh, kin, nout), jnp.float32)
    for x in range(width):  # one-time; W placements of the (KW*Cin, Cout) block
        a = a.at[:, x * cin:(x + kw) * cin,
                 x * cout_slot:x * cout_slot + cout].set(w_t)
    a = a.astype(compute_dtype)

    # Bias stays f32 (added to the f32 accumulator); pad slots are exact zeros.
    b = jnp.tile(jnp.pad(bias, (0, cout_slot - cout)), width)
    b = b.reshape(1, nout).astype(jnp.float32)
    return a, b


@functools.partial(jax.jit,
                   static_argnames=("kh", "kw", "padding", "cout", "cout_slot",
                                    "row_tile"))
def conv2d_same(x_nchw, a_toep, b_pack, *, kh=5, kw=5, padding=2, cout=11,
                cout_slot=COUT_SLOT, row_tile=256):
    """'same' conv2d (stride 1) matching nn.Conv2d(11, 11, 5, padding=2)."""
    n, cin, h, w = x_nchw.shape
    kin = (w + 2 * padding) * cin
    nout = w * cout_slot
    assert a_toep.shape == (kh, kin, nout) and b_pack.shape == (1, nout)
    compute_dtype = a_toep.dtype

    th = min(_round_up(h, 8), _round_up(row_tile, 8))   # rows per grid step
    nblk = pl.cdiv(h, th)
    r_pad = nblk * th + 8          # aligned halo headroom (>= kh-1 = 4 zero rows)

    # NCHW -> padded NHWC -> (N, rows, (W+4)*Cin).  One layout pass; the module
    # interface is NCHW (keep the surrounding model NHWC end-to-end to drop it).
    x_nhwc = jnp.transpose(x_nchw, (0, 2, 3, 1))
    xp = jnp.pad(x_nhwc, ((0, 0),
                          (padding, r_pad - h - padding),
                          (padding, padding),
                          (0, 0)))
    x_flat = xp.reshape(n, r_pad, kin).astype(compute_dtype)

    cost = pl.CostEstimate(
        flops=2 * n * nblk * kh * th * kin * nout,
        transcendentals=0,
        bytes_accessed=(x_flat.size * x_flat.dtype.itemsize
                        + a_toep.size * a_toep.dtype.itemsize
                        + b_pack.size * 4
                        + n * nblk * th * nout * 4),
    )

    kernel = functools.partial(_conv_rows_kernel, n_kh=kh, th=th)
    out_packed = pl.pallas_call(
        kernel,
        out_shape=jax.ShapeDtypeStruct((n, nblk * th, nout), x_nchw.dtype),
        grid_spec=pltpu.PrefetchScalarGridSpec(
            num_scalar_prefetch=0,
            grid=(n, nblk),
            in_specs=[
                # Whole padded image per batch element; index_map ignores the
                # row-block axis so it stays VMEM-resident across row blocks.
                pl.BlockSpec((None, r_pad, kin), lambda b, i: (b, 0, 0)),
                # Toeplitz weights + packed bias: constant index_map -> resident.
                pl.BlockSpec((kh, kin, nout), lambda b, i: (0, 0, 0)),
                pl.BlockSpec((1, nout), lambda b, i: (0, 0)),
            ],
            out_specs=pl.BlockSpec((None, th, nout), lambda b, i: (b, i, 0)),
        ),
        compiler_params=pltpu.CompilerParams(
            dimension_semantics=("parallel", "parallel")),
        cost_estimate=cost,
    )(x_flat, a_toep, b_pack)

    # Unpack: drop pad rows, split W x slot, drop the 5 zero slots, back to NCHW.
    out = out_packed[:, :h, :].reshape(n, h, w, cout_slot)[..., :cout]
    return jnp.transpose(out, (0, 3, 1, 2))


if __name__ == "__main__":
    key = jax.random.PRNGKey(0)
    k_x, k_w, k_b = jax.random.split(key, 3)

    # Small shapes consistent with the module: Conv2d expects 11 input channels.
    N, Cin, H, W = 2, 11, 16, 16
    Cout, KH, KW = 11, 5, 5

    x = jax.random.normal(k_x, (N, Cin, H, W), dtype=jnp.float32)

    # Deterministic PyTorch-style init (uniform bound 1/sqrt(fan_in)).
    bound = 1.0 / (Cin * KH * KW) ** 0.5
    weight = jax.random.uniform(k_w, (Cout, Cin, KH, KW), jnp.float32, -bound, bound)
    bias = jax.random.uniform(k_b, (Cout,), jnp.float32, -bound, bound)

    # One-time parameter prep.  compute_dtype=jnp.bfloat16 enables the
    # half-bandwidth / native-MXU read path (loosen tolerance to ~1e-2 if used).
    a_toep, b_pack = prepare_conv_params(weight, bias, W,
                                         compute_dtype=jnp.float32)

    out = conv2d_same(x, a_toep, b_pack, kh=KH, kw=KW, padding=2, cout=Cout)
    out = jax.block_until_ready(out)

    # Reference check against XLA's conv for the same semantics.
    ref = lax.conv_general_dilated(
        x, weight, window_strides=(1, 1), padding=((2, 2), (2, 2)),
        dimension_numbers=("NCHW", "OIHW", "NCHW"),
    ) + bias[None, :, None, None]
    assert out.shape == (N, Cout, H, W)
    err = float(jnp.max(jnp.abs(out - ref)))
    assert jnp.allclose(out, ref, atol=1e-4, rtol=1e-4), err

    print("KERNEL_OK")
</pallas_src>

<mosaic_0001>
module attributes {stable_mosaic.version = 11 : i64} {
  func.func @_conv_rows_kernel(%arg0: i32, %arg1: i32, %arg2: memref<1x24x220xf32, #tpu.memory_space<vmem>>, %arg3: memref<5x220x256xf32, #tpu.memory_space<vmem>>, %arg4: memref<1x256xf32, #tpu.memory_space<vmem>>, %arg5: memref<1x16x256xf32, #tpu.memory_space<vmem>>) attributes {dimension_semantics = [#tpu.dimension_semantics<parallel>, #tpu.dimension_semantics<parallel>], iteration_bounds = array<i64: 2, 1>, scalar_prefetch = 0 : i64, scratch_operands = 0 : i64, tpu.core_type = #tpu.core_type<tc>, window_params = [{transform_indices = @transform_0, window_bounds = array<i64: 1, 24, 220>}, {pipeline_mode = #tpu.pipeline_mode<synchronous>, transform_indices = @transform_1, window_bounds = array<i64: 5, 220, 256>}, {pipeline_mode = #tpu.pipeline_mode<synchronous>, transform_indices = @transform_2, window_bounds = array<i64: 1, 256>}, {transform_indices = @transform_3, window_bounds = array<i64: 1, 16, 256>}]} {
    %c16_i32 = arith.constant 16 : i32
    %0 = arith.muli %arg1, %c16_i32 : i32
    %1 = tpu.assume_multiple %0, 8 : i32
    %c0 = arith.constant 0 : index
    %2 = arith.index_cast %1 : i32 to index
    %c0_0 = arith.constant 0 : index
    %3 = vector.load %arg2[%c0, %2, %c0_0] : memref<1x24x220xf32, #tpu.memory_space<vmem>>, vector<1x24x220xf32>
    %4 = vector.shape_cast %3 : vector<1x24x220xf32> to vector<24x220xf32>
    %5 = vector.extract_strided_slice %4 {offsets = [0, 0], sizes = [16, 220], strides = [1, 1]} : vector<24x220xf32> to vector<16x220xf32>
    %c0_1 = arith.constant 0 : index
    %c0_2 = arith.constant 0 : index
    %c0_3 = arith.constant 0 : index
    %6 = vector.load %arg3[%c0_1, %c0_2, %c0_3] : memref<5x220x256xf32, #tpu.memory_space<vmem>>, vector<1x220x256xf32>
    %7 = vector.shape_cast %6 : vector<1x220x256xf32> to vector<220x256xf32>
    %cst = arith.constant dense<0.000000e+00> : vector<16x256xf32>
    %8 = tpu.matmul %5, %7, %cst {dimension_numbers = #tpu.dot_dimension_numbers<[1], [0], [0], [1], [0, 0, 1, 1], [], []>} : vector<16x220xf32>, vector<220x256xf32>, vector<16x256xf32> -> vector<16x256xf32>
    %9 = vector.extract_strided_slice %4 {offsets = [1, 0], sizes = [16, 220], strides = [1, 1]} : vector<24x220xf32> to vector<16x220xf32>
    %c1 = arith.constant 1 : index
    %c0_4 = arith.constant 0 : index
    %c0_5 = arith.constant 0 : index
    %10 = vector.load %arg3[%c1, %c0_4, %c0_5] : memref<5x220x256xf32, #tpu.memory_space<vmem>>, vector<1x220x256xf32>
    %11 = vector.shape_cast %10 : vector<1x220x256xf32> to vector<220x256xf32>
    %cst_6 = arith.constant dense<0.000000e+00> : vector<16x256xf32>
    %12 = tpu.matmul %9, %11, %cst_6 {dimension_numbers = #tpu.dot_dimension_numbers<[1], [0], [0], [1], [0, 0, 1, 1], [], []>} : vector<16x220xf32>, vector<220x256xf32>, vector<16x256xf32> -> vector<16x256xf32>
    %13 = arith.addf %8, %12 : vector<16x256xf32>
    %14 = vector.extract_strided_slice %4 {offsets = [2, 0], sizes = [16, 220], strides = [1, 1]} : vector<24x220xf32> to vector<16x220xf32>
    %c2 = arith.constant 2 : index
    %c0_7 = arith.constant 0 : index
    %c0_8 = arith.constant 0 : index
    %15 = vector.load %arg3[%c2, %c0_7, %c0_8] : memref<5x220x256xf32, #tpu.memory_space<vmem>>, vector<1x220x256xf32>
    %16 = vector.shape_cast %15 : vector<1x220x256xf32> to vector<220x256xf32>
    %cst_9 = arith.constant dense<0.000000e+00> : vector<16x256xf32>
    %17 = tpu.matmul %14, %16, %cst_9 {dimension_numbers = #tpu.dot_dimension_numbers<[1], [0], [0], [1], [0, 0, 1, 1], [], []>} : vector<16x220xf32>, vector<220x256xf32>, vector<16x256xf32> -> vector<16x256xf32>
    %18 = arith.addf %13, %17 : vector<16x256xf32>
    %19 = vector.extract_strided_slice %4 {offsets = [3, 0], sizes = [16, 220], strides = [1, 1]} : vector<24x220xf32> to vector<16x220xf32>
    %c3 = arith.constant 3 : index
    %c0_10 = arith.constant 0 : index
    %c0_11 = arith.constant 0 : index
    %20 = vector.load %arg3[%c3, %c0_10, %c0_11] : memref<5x220x256xf32, #tpu.memory_space<vmem>>, vector<1x220x256xf32>
    %21 = vector.shape_cast %20 : vector<1x220x256xf32> to vector<220x256xf32>
    %cst_12 = arith.constant dense<0.000000e+00> : vector<16x256xf32>
    %22 = tpu.matmul %19, %21, %cst_12 {dimension_numbers = #tpu.dot_dimension_numbers<[1], [0], [0], [1], [0, 0, 1, 1], [], []>} : vector<16x220xf32>, vector<220x256xf32>, vector<16x256xf32> -> vector<16x256xf32>
    %23 = arith.addf %18, %22 : vector<16x256xf32>
    %24 = vector.extract_strided_slice %4 {offsets = [4, 0], sizes = [16, 220], strides = [1, 1]} : vector<24x220xf32> to vector<16x220xf32>
    %c4 = arith.constant 4 : index
    %c0_13 = arith.constant 0 : index
    %c0_14 = arith.constant 0 : index
    %25 = vector.load %arg3[%c4, %c0_13, %c0_14] : memref<5x220x256xf32, #tpu.memory_space<vmem>>, vector<1x220x256xf32>
    %26 = vector.shape_cast %25 : vector<1x220x256xf32> to vector<220x256xf32>
    %cst_15 = arith.constant dense<0.000000e+00> : vector<16x256xf32>
    %27 = tpu.matmul %24, %26, %cst_15 {dimension_numbers = #tpu.dot_dimension_numbers<[1], [0], [0], [1], [0, 0, 1, 1], [], []>} : vector<16x220xf32>, vector<220x256xf32>, vector<16x256xf32> -> vector<16x256xf32>
    %28 = arith.addf %23, %27 : vector<16x256xf32>
    %c0_16 = arith.constant 0 : index
    %c0_17 = arith.constant 0 : index
    %29 = vector.load %arg4[%c0_16, %c0_17] : memref<1x256xf32, #tpu.memory_space<vmem>>, vector<1x256xf32>
    %30 = vector.broadcast %29 : vector<1x256xf32> to vector<16x256xf32>
    %31 = arith.addf %28, %30 : vector<16x256xf32>
    %c0_18 = arith.constant 0 : index
    %c0_19 = arith.constant 0 : index
    %c0_20 = arith.constant 0 : index
    %32 = vector.load %arg5[%c0_18, %c0_19, %c0_20] : memref<1x16x256xf32, #tpu.memory_space<vmem>>, vector<1x16x256xf32>
    %33 = vector.shape_cast %32 : vector<1x16x256xf32> to vector<16x256xf32>
    %34 = vector.shape_cast %31 : vector<16x256xf32> to vector<1x16x256xf32>
    tpu.vector_store %arg5[%c0_18, %c0_19, %c0_20], %34 {strides = array<i32>} : memref<1x16x256xf32, #tpu.memory_space<vmem>>, vector<1x16x256xf32>,
    return
  }
  func.func @transform_0(%arg0: i32, %arg1: i32) -> (i32, i32, i32) {
    %c0_i32 = arith.constant 0 : i32
    %c0_i32_0 = arith.constant 0 : i32
    %c0_i32_1 = arith.constant 0 : i32
    return %arg0, %c0_i32, %c0_i32_0 : i32, i32, i32
  }
  func.func @transform_1(%arg0: i32, %arg1: i32) -> (i32, i32, i32) {
    %c0_i32 = arith.constant 0 : i32
    %c0_i32_0 = arith.constant 0 : i32
    %c0_i32_1 = arith.constant 0 : i32
    %c0_i32_2 = arith.constant 0 : i32
    return %c0_i32, %c0_i32_0, %c0_i32_1 : i32, i32, i32
  }
  func.func @transform_2(%arg0: i32, %arg1: i32) -> (i32, i32) {
    %c0_i32 = arith.constant 0 : i32
    %c0_i32_0 = arith.constant 0 : i32
    %c0_i32_1 = arith.constant 0 : i32
    return %c0_i32, %c0_i32_0 : i32, i32
  }
  func.func @transform_3(%arg0: i32, %arg1: i32) -> (i32, i32, i32) {
    %c0_i32 = arith.constant 0 : i32
    %c0_i32_0 = arith.constant 0 : i32
    return %arg0, %arg1, %c0_i32 : i32, i32, i32
  }
}

</mosaic_0001>

<llo_original>
// kernel: conv2d_same.1
$region0: #{conv2d_same.1}
  #allocation0 [shape = 'u32[]', space=smem, size = 0x4, offset = 0x4, fixed_abs, tag = 'smem constant byte address 0x4 - core index']
  #allocation1 [shape = 'u32[144,128]{1,0:T(1,128)}', space=vmem, size = 0x12000, scoped, tag = 'internal scratch']
  %s0 = inlined_call_operand.vmem [shape: f32[2,24,220], index: 0, kind: input, shape index: {}]
  %s1 = inlined_call_operand.hbm [shape: f32[5,220,256], index: 1, kind: input, shape index: {}]
  %s2 = inlined_call_operand.hbm [shape: f32[1,256], index: 2, kind: input, shape index: {}]
  %s3 = inlined_call_operand.vmem [shape: f32[2,16,256], index: 3, kind: output, shape index: {}]
  %s4 = sld [smem:[#allocation0]]
  $region53: #{conv2d_same.1} parent=0
    _
  %s6 = ssub.s32 1, %s4
  %s7 = scalar_select 0, %s6, %s4
  $region1: #{conv2d_same.1} parent=0
    #allocation2 [shape = 'u8[1146880]{0}', space=vmem, size = 0x118000, scoped, tag = 'input window, operand 1, single buffered']
    #allocation3 [shape = 's32[2]{0}', space=sflag, size = 0x8, scoped, tag = 'scoped memory for conv2d_same.1']
    #allocation4 [shape = 'u8[1024]{0}', space=vmem, size = 0x400, scoped, tag = 'input window, operand 2, single buffered']
    #allocation5 [shape = 's32[1]{0}', space=sflag, size = 0x4, scoped, tag = 'scoped memory for conv2d_same.1']
    %8 = vsyncpa [#allocation3], 0
    %9 = vsyncpa [#allocation5], 0
    loop: start=0, step=1, limit=4
    $region2: #{conv2d_same.1} parent=1 // loop_pre_header
      _
    $region3: #{conv2d_same.1} parent=1 // loop_header
      %s11 = sphi 0, %s15
      %p12 = scmp.ge.s32.totalorder %s11, 4
      %s18 = sphi 0, %s30
      %s19 = sphi 0, %s26
      %s20 = sphi 0, %s18
      %s21 = sphi 0, %s19
      %s22 = sphi 0, %s20
      %s23 = sphi 0, %s21
      %s33 = sphi 0, %s35
      %s36 = sphi 0, %s33
      %s37 = sphi 0, %s36
      %s53 = sphi 0, %s37
      %s57 = sphi 0, %s57
      %s59 = sphi 0, %s57
      %s60 = sphi 0, %s59
      %s74 = sphi 0, %s60
      %s78 = sphi 0, %s78
      %s80 = sphi 0, %s78
      %s81 = sphi 0, %s80
      %s95 = sphi 0, %s81
      %s103 = sphi 0, %s105
      %s106 = sphi 0, %s103
      %s107 = sphi 0, %s106
      %s123 = sphi 0, %s107
    $region4: #{conv2d_same.1} parent=1 // loop_header_branch
      %14 = sbr.rel (%p12) target = $region8
    $region5: #{conv2d_same.1} parent=1 // loop_body
      %s16 = ssub.s32 %s11, 1
      %s17 = ssub.s32 %s11, 2
      %s24 = sadd.s32 1, %s19
      %p25 = scmp.ge.s32.totalorder %s24, 1
      %s26 = scalar_select %p25, 0, %s24
      %s27 = sadd.s32 1, %s18
      %s28 = scalar_select %p25, %s27, %s18
      %p29 = scmp.ge.s32.totalorder %s28, 2
      %s30 = scalar_select %p29, 0, %s28
      %s31 = ssub.s32 %s18, %s30
      %p32 = scmp.eq.s32.totalorder %s31, 0
      %s34 = sadd.s32 %s33, 1
      %s35 = scalar_select %p32, %s33, %s34
      %p38 = pneg %p32
      %p39 = scmp.eq.s32.totalorder %s11, 1
      %p40 = por %p38, %p39
      %p41 = scmp.ne.s32.totalorder %s33, %s36
      %p42 = scmp.eq.s32.totalorder %s11, 0
      %p43 = por %p41, %p42
      %p44 = scmp.ne.s32.totalorder %s33, %s36
      %p45 = scmp.eq.s32.totalorder %s16, 1
      %p46 = por %p44, %p45
      %p47 = scmp.ne.s32.totalorder %s36, %s37
      %p48 = scmp.eq.s32.totalorder %s16, 0
      %p49 = por %p47, %p48
      %p50 = scmp.ne.s32.totalorder %s36, %s37
      %p51 = scmp.eq.s32.totalorder %s17, 1
      %p52 = por %p50, %p51
      %p54 = scmp.ne.s32.totalorder %s37, %s53
      %p55 = scmp.eq.s32.totalorder %s17, 0
      %p56 = por %p54, %p55
      %s58 = sadd.s32 %s57, 1
      %p61 = scmp.eq.s32.totalorder %s11, 1
      %p62 = scmp.ne.s32.totalorder %s57, %s59
      %p63 = scmp.eq.s32.totalorder %s11, 0
      %p64 = por %p62, %p63
      %p65 = scmp.ne.s32.totalorder %s57, %s59
      %p66 = scmp.eq.s32.totalorder %s16, 1
      %p67 = por %p65, %p66
      %p68 = scmp.ne.s32.totalorder %s59, %s60
      %p69 = scmp.eq.s32.totalorder %s16, 0
      %p70 = por %p68, %p69
      %p71 = scmp.ne.s32.totalorder %s59, %s60
      %p72 = scmp.eq.s32.totalorder %s17, 1
      %p73 = por %p71, %p72
      %p75 = scmp.ne.s32.totalorder %s60, %s74
      %p76 = scmp.eq.s32.totalorder %s17, 0
      %p77 = por %p75, %p76
      %s79 = sadd.s32 %s78, 1
      %p82 = scmp.eq.s32.totalorder %s11, 1
      %p83 = scmp.ne.s32.totalorder %s78, %s80
      %p84 = scmp.eq.s32.totalorder %s11, 0
      %p85 = por %p83, %p84
      %p86 = scmp.ne.s32.totalorder %s78, %s80
      %p87 = scmp.eq.s32.totalorder %s16, 1
      %p88 = por %p86, %p87
      %p89 = scmp.ne.s32.totalorder %s80, %s81
      %p90 = scmp.eq.s32.totalorder %s16, 0
      %p91 = por %p89, %p90
      %p92 = scmp.ne.s32.totalorder %s80, %s81
      %p93 = scmp.eq.s32.totalorder %s17, 1
      %p94 = por %p92, %p93
      %p96 = scmp.ne.s32.totalorder %s81, %s95
      %p97 = scmp.eq.s32.totalorder %s17, 0
      %p98 = por %p96, %p97
      %s99 = ssub.s32 %s18, %s30
      %s100 = ssub.s32 %s19, %s26
      %s101 = sor.u32 %s99, %s100
      %p102 = scmp.eq.s32.totalorder %s101, 0
      %s104 = sadd.s32 %s103, 1
      %s105 = scalar_select %p102, %s103, %s104
      %p108 = pneg %p102
      %p109 = scmp.eq.s32.totalorder %s11, 1
      %p110 = por %p108, %p109
      %p111 = scmp.ne.s32.totalorder %s103, %s106
      %p112 = scmp.eq.s32.totalorder %s11, 0
      %p113 = por %p111, %p112
      %p114 = scmp.ne.s32.totalorder %s103, %s106
      %p115 = scmp.eq.s32.totalorder %s16, 1
      %p116 = por %p114, %p115
      %p117 = scmp.ne.s32.totalorder %s106, %s107
      %p118 = scmp.eq.s32.totalorder %s16, 0
      %p119 = por %p117, %p118
      %p120 = scmp.ne.s32.totalorder %s106, %s107
      %p121 = scmp.eq.s32.totalorder %s17, 1
      %p122 = por %p120, %p121
      %p124 = scmp.ne.s32.totalorder %s107, %s123
      %p125 = scmp.eq.s32.totalorder %s17, 0
      %p126 = por %p124, %p125
      %p127 = scmp.le.s32.totalorder 1, %s11
      %p128 = scmp.lt.s32.totalorder %s11, 3
      %p129 = pnand %p127, %p128
      %p130 = pneg %p129
      // Predicated region
      $region9: #{conv2d_same.1} parent=5 // pred_check
        _
      $region10: #{conv2d_same.1} parent=5 // pred_check_branch
        %132 = sbr.rel (%p129) target = $region12
      $region11: #{conv2d_same.1} parent=5 // pred_region
        %s133 = ssub.s32 %s11, 1
        // Predicated region
        $region13: #{conv2d_same.1} parent=11 // pred_check
          %p134 = pneg %p70
        $region14: #{conv2d_same.1} parent=11 // pred_check_branch
          %136 = sbr.rel (%p134) target = $region16
        $region15: #{conv2d_same.1} parent=11 // pred_region
          %s138 = ssub.s32 35840, 35840
          %139 = vsyncadd [#allocation3], %s138
          %s140 = sshll.u32 [#allocation2], 4
          %s141 = int_to_ptr.vmem [resolvable:$true] %s140
          %146 = dma.hbm_to_vmem [thread:$0]  %s1, 35840, %s141, [#allocation3], 256, 256, 16
        $region16: #{conv2d_same.1} parent=11 // pred_fallthru
          _
        // Predicated region
        $region17: #{conv2d_same.1} parent=11 // pred_check
          %p147 = pneg %p91
        $region18: #{conv2d_same.1} parent=11 // pred_check_branch
          %149 = sbr.rel (%p147) target = $region20
        $region19: #{conv2d_same.1} parent=11 // pred_region
          %s151 = ssub.s32 32, 32
          %152 = vsyncadd [#allocation5], %s151
          %s154 = sshll.u32 [#allocation4], 4
          %s155 = int_to_ptr.vmem [resolvable:$true] %s154
          %157 = dma.hbm_to_vmem [thread:$0]  %s2, 32, %s155, [#allocation5]
        $region20: #{conv2d_same.1} parent=11 // pred_fallthru
          _
      $region12: #{conv2d_same.1} parent=5 // pred_fallthru
        _
      %p158 = scmp.lt.s32.totalorder %s11, 2
      // Predicated region
      $region21: #{conv2d_same.1} parent=5 // pred_check
        %p159 = pneg %p158
      $region22: #{conv2d_same.1} parent=5 // pred_check_branch
        %161 = sbr.rel (%p159) target = $region24
      $region23: #{conv2d_same.1} parent=5 // pred_region
        // Predicated region
        $region25: #{conv2d_same.1} parent=23 // pred_check
          %p162 = pneg %p43
        $region26: #{conv2d_same.1} parent=23 // pred_check_branch
          %164 = sbr.rel (%p162) target = $region28
        $region27: #{conv2d_same.1} parent=23 // pred_region
          %p165 = scmp.lt.s32.totalorder %s18, 1
          %s166 = scalar_select %p165, %s18, 1
          %s167 = smul.addr %s166, 6
          %s168 = smul.addr %s167, 8
          %s169 = scalar_lea.vmem %s0, %s168
        $region28: #{conv2d_same.1} parent=23 // pred_fallthru
          _
      $region24: #{conv2d_same.1} parent=5 // pred_fallthru
        _
      %p170 = scmp.le.s32.totalorder 1, %s11
      %p171 = scmp.lt.s32.totalorder %s11, 3
      %p172 = pnand %p170, %p171
      %p173 = pneg %p172
      // Predicated region
      $region29: #{conv2d_same.1} parent=5 // pred_check
        _
      $region30: #{conv2d_same.1} parent=5 // pred_check_branch
        %175 = sbr.rel (%p172) target = $region32
      $region31: #{conv2d_same.1} parent=5 // pred_region
        %s176 = ssub.s32 %s11, 1
        // Predicated region
        $region33: #{conv2d_same.1} parent=31 // pred_check
          %p177 = pneg %p70
        $region34: #{conv2d_same.1} parent=31 // pred_check_branch
          %179 = sbr.rel (%p177) target = $region36
        $region35: #{conv2d_same.1} parent=31 // pred_region
          %180 = dma.done [#allocation3], 35840
        $region36: #{conv2d_same.1} parent=31 // pred_fallthru
          _
        // Predicated region
        $region37: #{conv2d_same.1} parent=31 // pred_check
          %p181 = pneg %p91
        $region38: #{conv2d_same.1} parent=31 // pred_check_branch
          %183 = sbr.rel (%p181) target = $region40
        $region39: #{conv2d_same.1} parent=31 // pred_region
          %184 = dma.done [#allocation5], 32
        $region40: #{conv2d_same.1} parent=31 // pred_fallthru
          _
        %p185 = scmp.lt.s32.totalorder %s20, 1
        %s186 = scalar_select %p185, %s20, 1
        %s187 = smul.addr %s186, 6
        %s188 = smul.addr %s187, 8
        %s189 = scalar_lea.vmem %s0, %s188
        %p190 = pneg %p49
        %p191 = pneg %p46
        %p192 = pneg %p70
        %p193 = pneg %p67
        %p194 = pneg %p91
        %p195 = pneg %p88
        %p196 = pneg %p119
        %p197 = pneg %p116
        %s198 = smul.u32 2, %s21
        %p199 = scmp.lt.s32.totalorder %s20, 1
        %s200 = scalar_select %p199, %s20, 1
        %p201 = scmp.lt.s32.totalorder %s198, 1
        %s202 = scalar_select %p201, %s198, 1
        %s203 = smul.addr %s202, 2
        %s204 = smul.addr %s200, 4
        %s205 = sadd.s32 %s203, %s204
        %s206 = smul.addr %s205, 8
        %s207 = scalar_lea.vmem %s3, %s206
        %p208 = scmp.lt.s32.totalorder %s20, 1
        %s209 = scalar_select %p208, %s20, 1
        %s210 = smul.addr %s209, 6
        %s211 = smul.addr %s210, 8
        %s212 = scalar_lea.vmem %s0, %s211
        %s213 = smul.u32 2, %s21
        %p214 = scmp.lt.s32.totalorder %s20, 1
        %s215 = scalar_select %p214, %s20, 1
        %p216 = scmp.lt.s32.totalorder %s213, 1
        %s217 = scalar_select %p216, %s213, 1
        %s218 = smul.addr %s217, 2
        %s219 = smul.addr %s215, 4
        %s220 = sadd.s32 %s218, %s219
        %s221 = smul.addr %s220, 8
        %s222 = scalar_lea.vmem %s3, %s221
        %s223 = smul.u32 2, %s21
        %s224 = smul.u32 %s21, 16
        %s225 = sshra.s32 %s224, 3
        %s226 = sand.u32 %s224, 7
        %s227 = smul.u32 %s225, 2
        %s228 = smul.addr %s227, 8
        %s229 = scalar_lea.vmem %s212, %s228
        %v230 = vld [vmem:[%s229] sm:$0xff]
        %v231 = vld [vmem:[%s229 + $0x8] sm:$0xff]
        %v232 = vld [vmem:[%s229 + $0x10] sm:$0xff]
        %v233 = vld [vmem:[%s229 + $0x18] sm:$0xff]
        %v234 = vld [vmem:[%s229 + $0x20] sm:$0xff]
        %v235 = vld [vmem:[%s229 + $0x28] sm:$0xff]
        %v236 = vld [vmem:[#allocation2] sm:$0xff]
        %v237 = vld [vmem:[#allocation2 + $0x8] sm:$0xff]
        %v238 = vld [vmem:[#allocation2 + $0x10] sm:$0xff]
        %v239 = vld [vmem:[#allocation2 + $0x18] sm:$0xff]
        %v240 = vld [vmem:[#allocation2 + $0x20] sm:$0xff]
        %v241 = vld [vmem:[#allocation2 + $0x28] sm:$0xff]
        %v242 = vld [vmem:[#allocation2 + $0x30] sm:$0xff]
        %v243 = vld [vmem:[#allocation2 + $0x38] sm:$0xff]
        %v244 = vld [vmem:[#allocation2 + $0x40] sm:$0xff]
        %v245 = vld [vmem:[#allocation2 + $0x48] sm:$0xff]
        %v246 = vld [vmem:[#allocation2 + $0x50] sm:$0xff]
        %v247 = vld [vmem:[#allocation2 + $0x58] sm:$0xff]
        %v248 = vld [vmem:[#allocation2 + $0x60] sm:$0xff]
        %v249 = vld [vmem:[#allocation2 + $0x68] sm:$0xff]
        %v250 = vld [vmem:[#allocation2 + $0x70] sm:$0xff]
        %v251 = vld [vmem:[#allocation2 + $0x78] sm:$0xff]
        %v252 = vld [vmem:[#allocation2 + $0x80] sm:$0xff]
        %v253 = vld [vmem:[#allocation2 + $0x88] sm:$0xff]
        %v254 = vld [vmem:[#allocation2 + $0x90] sm:$0xff]
        %v255 = vld [vmem:[#allocation2 + $0x98] sm:$0xff]
        %v256 = vld [vmem:[#allocation2 + $0xa0] sm:$0xff]
        %v257 = vld [vmem:[#allocation2 + $0xa8] sm:$0xff]
        %v258 = vld [vmem:[#allocation2 + $0xb0] sm:$0xff]
        %v259 = vld [vmem:[#allocation2 + $0xb8] sm:$0xff]
        %v260 = vld [vmem:[#allocation2 + $0xc0] sm:$0xff]
        %v261 = vld [vmem:[#allocation2 + $0xc8] sm:$0xff]
        %v262 = vld [vmem:[#allocation2 + $0xd0] sm:$0xff]
        %v263 = vld [vmem:[#allocation2 + $0xd8] sm:$0xff]
        %v264 = vld [vmem:[#allocation2 + $0xe0] sm:$0xff]
        %v265 = vld [vmem:[#allocation2 + $0xe8] sm:$0xff]
        %v266 = vld [vmem:[#allocation2 + $0xf0] sm:$0xff]
        %v267 = vld [vmem:[#allocation2 + $0xf8] sm:$0xff]
        %v268 = vld [vmem:[#allocation2 + $0x100] sm:$0xff]
        %v269 = vld [vmem:[#allocation2 + $0x108] sm:$0xff]
        %v270 = vld [vmem:[#allocation2 + $0x110] sm:$0xff]
        %v271 = vld [vmem:[#allocation2 + $0x118] sm:$0xff]
        %v272 = vld [vmem:[#allocation2 + $0x120] sm:$0xff]
        %v273 = vld [vmem:[#allocation2 + $0x128] sm:$0xff]
        %v274 = vld [vmem:[#allocation2 + $0x130] sm:$0xff]
        %v275 = vld [vmem:[#allocation2 + $0x138] sm:$0xff]
        %v276 = vld [vmem:[#allocation2 + $0x140] sm:$0xff]
        %v277 = vld [vmem:[#allocation2 + $0x148] sm:$0xff]
        %v278 = vld [vmem:[#allocation2 + $0x150] sm:$0xff]
        %v279 = vld [vmem:[#allocation2 + $0x158] sm:$0xff]
        %v280 = vld [vmem:[#allocation2 + $0x160] sm:$0xff]
        %v281 = vld [vmem:[#allocation2 + $0x168] sm:$0xff]
        %v282 = vld [vmem:[#allocation2 + $0x170] sm:$0xff]
        %v283 = vld [vmem:[#allocation2 + $0x178] sm:$0xff]
        %v284 = vld [vmem:[#allocation2 + $0x180] sm:$0xff]
        %v285 = vld [vmem:[#allocation2 + $0x188] sm:$0xff]
        %v286 = vld [vmem:[#allocation2 + $0x190] sm:$0xff]
        %v287 = vld [vmem:[#allocation2 + $0x198] sm:$0xff]
        %v288 = vld [vmem:[#allocation2 + $0x1a0] sm:$0xff]
        %v289 = vld [vmem:[#allocation2 + $0x1a8] sm:$0xff]
        %v290 = vld [vmem:[#allocation2 + $0x1b0] sm:$0xf]
        %v291 = vld [vmem:[#allocation2 + $0x1b8] sm:$0xf]
        %s292 = scalar_lea.vmem [#allocation2], 448
        %v293 = vld [vmem:[%s292] sm:$0xff]
        %v294 = vld [vmem:[%s292 + $0x8] sm:$0xff]
        %v295 = vld [vmem:[%s292 + $0x10] sm:$0xff]
        %v296 = vld [vmem:[%s292 + $0x18] sm:$0xff]
        %v297 = vld [vmem:[%s292 + $0x20] sm:$0xff]
        %v298 = vld [vmem:[%s292 + $0x28] sm:$0xff]
        %v299 = vld [vmem:[%s292 + $0x30] sm:$0xff]
        %v300 = vld [vmem:[%s292 + $0x38] sm:$0xff]
        %v301 = vld [vmem:[%s292 + $0x40] sm:$0xff]
        %v302 = vld [vmem:[%s292 + $0x48] sm:$0xff]
        %v303 = vld [vmem:[%s292 + $0x50] sm:$0xff]
        %v304 = vld [vmem:[%s292 + $0x58] sm:$0xff]
        %v305 = vld [vmem:[%s292 + $0x60] sm:$0xff]
        %v306 = vld [vmem:[%s292 + $0x68] sm:$0xff]
        %v307 = vld [vmem:[%s292 + $0x70] sm:$0xff]
        %v308 = vld [vmem:[%s292 + $0x78] sm:$0xff]
        %v309 = vld [vmem:[%s292 + $0x80] sm:$0xff]
        %v310 = vld [vmem:[%s292 + $0x88] sm:$0xff]
        %v311 = vld [vmem:[%s292 + $0x90] sm:$0xff]
        %v312 = vld [vmem:[%s292 + $0x98] sm:$0xff]
        %v313 = vld [vmem:[%s292 + $0xa0] sm:$0xff]
        %v314 = vld [vmem:[%s292 + $0xa8] sm:$0xff]
        %v315 = vld [vmem:[%s292 + $0xb0] sm:$0xff]
        %v316 = vld [vmem:[%s292 + $0xb8] sm:$0xff]
        %v317 = vld [vmem:[%s292 + $0xc0] sm:$0xff]
        %v318 = vld [vmem:[%s292 + $0xc8] sm:$0xff]
        %v319 = vld [vmem:[%s292 + $0xd0] sm:$0xff]
        %v320 = vld [vmem:[%s292 + $0xd8] sm:$0xff]
        %v321 = vld [vmem:[%s292 + $0xe0] sm:$0xff]
        %v322 = vld [vmem:[%s292 + $0xe8] sm:$0xff]
        %v323 = vld [vmem:[%s292 + $0xf0] sm:$0xff]
        %v324 = vld [vmem:[%s292 + $0xf8] sm:$0xff]
        %v325 = vld [vmem:[%s292 + $0x100] sm:$0xff]
        %v326 = vld [vmem:[%s292 + $0x108] sm:$0xff]
        %v327 = vld [vmem:[%s292 + $0x110] sm:$0xff]
        %v328 = vld [vmem:[%s292 + $0x118] sm:$0xff]
        %v329 = vld [vmem:[%s292 + $0x120] sm:$0xff]
        %v330 = vld [vmem:[%s292 + $0x128] sm:$0xff]
        %v331 = vld [vmem:[%s292 + $0x130] sm:$0xff]
        %v332 = vld [vmem:[%s292 + $0x138] sm:$0xff]
        %v333 = vld [vmem:[%s292 + $0x140] sm:$0xff]
        %v334 = vld [vmem:[%s292 + $0x148] sm:$0xff]
        %v335 = vld [vmem:[%s292 + $0x150] sm:$0xff]
        %v336 = vld [vmem:[%s292 + $0x158] sm:$0xff]
        %v337 = vld [vmem:[%s292 + $0x160] sm:$0xff]
        %v338 = vld [vmem:[%s292 + $0x168] sm:$0xff]
        %v339 = vld [vmem:[%s292 + $0x170] sm:$0xff]
        %v340 = vld [vmem:[%s292 + $0x178] sm:$0xff]
        %v341 = vld [vmem:[%s292 + $0x180] sm:$0xff]
        %v342 = vld [vmem:[%s292 + $0x188] sm:$0xff]
        %v343 = vld [vmem:[%s292 + $0x190] sm:$0xff]
        %v344 = vld [vmem:[%s292 + $0x198] sm:$0xff]
        %v345 = vld [vmem:[%s292 + $0x1a0] sm:$0xff]
        %v346 = vld [vmem:[%s292 + $0x1a8] sm:$0xff]
        %v347 = vld [vmem:[%s292 + $0x1b0] sm:$0xf]
        %v348 = vld [vmem:[%s292 + $0x1b8] sm:$0xf]
        %vm355 = vcmask 1046528
        %v356 = vrot.slane %v230, 1
        %v357 = vrot.slane %v232, 1
        %v358 = vsel %vm355, %v356, %v357
        %v359 = vrot.slane %v231, 1
        %v360 = vrot.slane %v233, 1
        %v361 = vsel %vm355, %v359, %v360
        %v362 = vrot.slane %v234, 1
        %v363 = vsel %vm355, %v357, %v362
        %v364 = vrot.slane %v235, 1
        %v365 = vsel %vm355, %v360, %v364
        %vm368 = vcmask 752640
        %v369 = vsel %vm368, %v361, 0
        %v371 = vsel %vm368, %v365, 0
        %vm373 = vcmask 1043456
        %v375 = vsel %vm373, %v347, 0
        %v378 = vsel %vm373, %v348, 0
        %380 = vmatprep.subr.mxu0 %v294
        %381 = vmatpush1.msra.mxu0 %v293
        %382 = vmatprep.subr.mxu0 %v296
        %383 = vmatpush1.msra.mxu0 %v295
        %384 = vmatprep.subr.mxu0 %v298
        %385 = vmatpush1.msra.mxu0 %v297
        %386 = vmatprep.subr.mxu0 %v300
        %387 = vmatpush1.msra.mxu0 %v299
        %388 = vmatprep.subr.mxu0 %v302
        %389 = vmatpush1.msra.mxu0 %v301
        %390 = vmatprep.subr.mxu0 %v304
        %391 = vmatpush1.msra.mxu0 %v303
        %392 = vmatprep.subr.mxu0 %v306
        %393 = vmatpush1.msra.mxu0 %v305
        %394 = vmatprep.subr.mxu0 %v308
        %395 = vmatpush1.msra.mxu0 %v307
        %396 = vmatprep.subr.mxu0 %v310
        %397 = vmatpush1.msra.mxu0 %v309
        %398 = vmatprep.subr.mxu0 %v312
        %399 = vmatpush1.msra.mxu0 %v311
        %400 = vmatprep.subr.mxu0 %v314
        %401 = vmatpush1.msra.mxu0 %v313
        %402 = vmatprep.subr.mxu0 %v316
        %403 = vmatpush1.msra.mxu0 %v315
        %404 = vmatprep.subr.mxu0 %v318
        %405 = vmatpush1.msra.mxu0 %v317
        %406 = vmatprep.subr.mxu0 %v320
        %407 = vmatpush1.msra.mxu0 %v319
        %408 = vmatprep.subr.mxu0 %v322
        %409 = vmatpush1.msra.mxu0 %v321
        %410 = vmatprep.subr.mxu0 %v324
        %411 = vmatpush1.msra.mxu0 %v323
        %412 = vmatprep.subr.mxu0 %v326
        %413 = vmatpush1.msra.mxu0 %v325
        %414 = vmatprep.subr.mxu0 %v328
        %415 = vmatpush1.msra.mxu0 %v327
        %416 = vmatprep.subr.mxu0 %v330
        %417 = vmatpush1.msra.mxu0 %v329
        %418 = vmatprep.subr.mxu0 %v332
        %419 = vmatpush1.msra.mxu0 %v331
        %420 = vmatprep.subr.mxu0 %v334
        %421 = vmatpush1.msra.mxu0 %v333
        %422 = vmatprep.subr.mxu0 %v336
        %423 = vmatpush1.msra.mxu0 %v335
        %424 = vmatprep.subr.mxu0 %v338
        %425 = vmatpush1.msra.mxu0 %v337
        %426 = vmatprep.subr.mxu0 %v340
        %427 = vmatpush1.msra.mxu0 %v339
        %428 = vmatprep.subr.mxu0 %v342
        %429 = vmatpush1.msra.mxu0 %v341
        %430 = vmatprep.subr.mxu0 %v344
        %431 = vmatpush1.msra.mxu0 %v343
        %432 = vmatprep.subr.mxu0 %v346
        %433 = vmatpush1.msra.mxu0 %v345
        %434 = vmatprep.subr.mxu0 %v378
        %435 = vmatpush1.msra.mxu0 %v375
        %436 = vmatprep.subr.mxu0 0.0
        %437 = vmatpush1.msra.mxu0 0.0
        %438 = vmatprep.subr.mxu0 0.0
        %439 = vmatpush1.msra.mxu0 0.0
        %440 = vmatprep.subr.mxu0 0.0
        %441 = vmatpush1.msra.mxu0 0.0
        %442 = vmatprep.subr.mxu0 0.0
        %443 = vmatpush1.msra.mxu0 0.0
        %444 = vmatprep.mubr.f32.mxu0 %v369
        %445 = vmatmul.mubr.f32.gmra.mrb[0].mxu0 %v358
        %v446 = vpop.f32.mrb[0].mxu0
        %v447 = vadd.f32 0.0, %v446
        %v448 = vpop.f32.mrb[0].mxu0
        %v449 = vadd.f32 0.0, %v448
        %450 = vmatprep.mubr.f32.mxu0 %v371
        %451 = vmatmul.mubr.f32.gmra.mrb[0].mxu0 %v363
        %v452 = vpop.f32.mrb[0].mxu0
        %v453 = vadd.f32 0.0, %v452
        %v454 = vpop.f32.mrb[0].mxu0
        %v455 = vadd.f32 0.0, %v454
        %456 = vdwg.mxu0
        %v457 = vsel %vm368, %v231, 0
        %v459 = vsel %vm368, %v233, 0
        %v462 = vsel %vm373, %v290, 0
        %v465 = vsel %vm373, %v291, 0
        %467 = vmatprep.subr.mxu0 %v237
        %468 = vmatpush1.msra.mxu0 %v236
        %469 = vmatprep.subr.mxu0 %v239
        %470 = vmatpush1.msra.mxu0 %v238
        %471 = vmatprep.subr.mxu0 %v241
        %472 = vmatpush1.msra.mxu0 %v240
        %473 = vmatprep.subr.mxu0 %v243
        %474 = vmatpush1.msra.mxu0 %v242
        %475 = vmatprep.subr.mxu0 %v245
        %476 = vmatpush1.msra.mxu0 %v244
        %477 = vmatprep.subr.mxu0 %v247
        %478 = vmatpush1.msra.mxu0 %v246
        %479 = vmatprep.subr.mxu0 %v249
        %480 = vmatpush1.msra.mxu0 %v248
        %481 = vmatprep.subr.mxu0 %v251
        %482 = vmatpush1.msra.mxu0 %v250
        %483 = vmatprep.subr.mxu0 %v253
        %484 = vmatpush1.msra.mxu0 %v252
        %485 = vmatprep.subr.mxu0 %v255
        %486 = vmatpush1.msra.mxu0 %v254
        %487 = vmatprep.subr.mxu0 %v257
        %488 = vmatpush1.msra.mxu0 %v256
        %489 = vmatprep.subr.mxu0 %v259
        %490 = vmatpush1.msra.mxu0 %v258
        %491 = vmatprep.subr.mxu0 %v261
        %492 = vmatpush1.msra.mxu0 %v260
        %493 = vmatprep.subr.mxu0 %v263
        %494 = vmatpush1.msra.mxu0 %v262
        %495 = vmatprep.subr.mxu0 %v265
        %496 = vmatpush1.msra.mxu0 %v264
        %497 = vmatprep.subr.mxu0 %v267
        %498 = vmatpush1.msra.mxu0 %v266
        %499 = vmatprep.subr.mxu0 %v269
        %500 = vmatpush1.msra.mxu0 %v268
        %501 = vmatprep.subr.mxu0 %v271
        %502 = vmatpush1.msra.mxu0 %v270
        %503 = vmatprep.subr.mxu0 %v273
        %504 = vmatpush1.msra.mxu0 %v272
        %505 = vmatprep.subr.mxu0 %v275
        %506 = vmatpush1.msra.mxu0 %v274
        %507 = vmatprep.subr.mxu0 %v277
        %508 = vmatpush1.msra.mxu0 %v276
        %509 = vmatprep.subr.mxu0 %v279
        %510 = vmatpush1.msra.mxu0 %v278
        %511 = vmatprep.subr.mxu0 %v281
        %512 = vmatpush1.msra.mxu0 %v280
        %513 = vmatprep.subr.mxu0 %v283
        %514 = vmatpush1.msra.mxu0 %v282
        %515 = vmatprep.subr.mxu0 %v285
        %516 = vmatpush1.msra.mxu0 %v284
        %517 = vmatprep.subr.mxu0 %v287
        %518 = vmatpush1.msra.mxu0 %v286
        %519 = vmatprep.subr.mxu0 %v289
        %520 = vmatpush1.msra.mxu0 %v288
        %521 = vmatprep.subr.mxu0 %v465
        %522 = vmatpush1.msra.mxu0 %v462
        %523 = vmatprep.subr.mxu0 0.0
        %524 = vmatpush1.msra.mxu0 0.0
        %525 = vmatprep.subr.mxu0 0.0
        %526 = vmatpush1.msra.mxu0 0.0
        %527 = vmatprep.subr.mxu0 0.0
        %528 = vmatpush1.msra.mxu0 0.0
        %529 = vmatprep.subr.mxu0 0.0
        %530 = vmatpush1.msra.mxu0 0.0
        %531 = vmatprep.mubr.f32.mxu0 %v457
        %532 = vmatmul.mubr.f32.gmra.mrb[0].mxu0 %v230
        %v533 = vpop.f32.mrb[0].mxu0
        %v534 = vadd.f32 %v447, %v533
        %v535 = vpop.f32.mrb[0].mxu0
        %v536 = vadd.f32 %v449, %v535
        %537 = vmatprep.mubr.f32.mxu0 %v459
        %538 = vmatmul.mubr.f32.gmra.mrb[0].mxu0 %v232
        %v539 = vpop.f32.mrb[0].mxu0
        %v540 = vadd.f32 %v453, %v539
        %v541 = vpop.f32.mrb[0].mxu0
        %v542 = vadd.f32 %v455, %v541
        %543 = vdwg.mxu0
        %s544 = scalar_lea.vmem [#allocation2], 896
        %v545 = vld [vmem:[%s544] sm:$0xff]
        %v546 = vld [vmem:[%s544 + $0x8] sm:$0xff]
        %v547 = vld [vmem:[%s544 + $0x10] sm:$0xff]
        %v548 = vld [vmem:[%s544 + $0x18] sm:$0xff]
        %v549 = vld [vmem:[%s544 + $0x20] sm:$0xff]
        %v550 = vld [vmem:[%s544 + $0x28] sm:$0xff]
        %v551 = vld [vmem:[%s544 + $0x30] sm:$0xff]
        %v552 = vld [vmem:[%s544 + $0x38] sm:$0xff]
        %v553 = vld [vmem:[%s544 + $0x40] sm:$0xff]
        %v554 = vld [vmem:[%s544 + $0x48] sm:$0xff]
        %v555 = vld [vmem:[%s544 + $0x50] sm:$0xff]
        %v556 = vld [vmem:[%s544 + $0x58] sm:$0xff]
        %v557 = vld [vmem:[%s544 + $0x60] sm:$0xff]
        %v558 = vld [vmem:[%s544 + $0x68] sm:$0xff]
        %v559 = vld [vmem:[%s544 + $0x70] sm:$0xff]
        %v560 = vld [vmem:[%s544 + $0x78] sm:$0xff]
        %v561 = vld [vmem:[%s544 + $0x80] sm:$0xff]
        %v562 = vld [vmem:[%s544 + $0x88] sm:$0xff]
        %v563 = vld [vmem:[%s544 + $0x90] sm:$0xff]
        %v564 = vld [vmem:[%s544 + $0x98] sm:$0xff]
        %v565 = vld [vmem:[%s544 + $0xa0] sm:$0xff]
        %v566 = vld [vmem:[%s544 + $0xa8] sm:$0xff]
        %v567 = vld [vmem:[%s544 + $0xb0] sm:$0xff]
        %v568 = vld [vmem:[%s544 + $0xb8] sm:$0xff]
        %v569 = vld [vmem:[%s544 + $0xc0] sm:$0xff]
        %v570 = vld [vmem:[%s544 + $0xc8] sm:$0xff]
        %v571 = vld [vmem:[%s544 + $0xd0] sm:$0xff]
        %v572 = vld [vmem:[%s544 + $0xd8] sm:$0xff]
        %v573 = vld [vmem:[%s544 + $0xe0] sm:$0xff]
        %v574 = vld [vmem:[%s544 + $0xe8] sm:$0xff]
        %v575 = vld [vmem:[%s544 + $0xf0] sm:$0xff]
        %v576 = vld [vmem:[%s544 + $0xf8] sm:$0xff]
        %v577 = vld [vmem:[%s544 + $0x100] sm:$0xff]
        %v578 = vld [vmem:[%s544 + $0x108] sm:$0xff]
        %v579 = vld [vmem:[%s544 + $0x110] sm:$0xff]
        %v580 = vld [vmem:[%s544 + $0x118] sm:$0xff]
        %v581 = vld [vmem:[%s544 + $0x120] sm:$0xff]
        %v582 = vld [vmem:[%s544 + $0x128] sm:$0xff]
        %v583 = vld [vmem:[%s544 + $0x130] sm:$0xff]
        %v584 = vld [vmem:[%s544 + $0x138] sm:$0xff]
        %v585 = vld [vmem:[%s544 + $0x140] sm:$0xff]
        %v586 = vld [vmem:[%s544 + $0x148] sm:$0xff]
        %v587 = vld [vmem:[%s544 + $0x150] sm:$0xff]
        %v588 = vld [vmem:[%s544 + $0x158] sm:$0xff]
        %v589 = vld [vmem:[%s544 + $0x160] sm:$0xff]
        %v590 = vld [vmem:[%s544 + $0x168] sm:$0xff]
        %v591 = vld [vmem:[%s544 + $0x170] sm:$0xff]
        %v592 = vld [vmem:[%s544 + $0x178] sm:$0xff]
        %v593 = vld [vmem:[%s544 + $0x180] sm:$0xff]
        %v594 = vld [vmem:[%s544 + $0x188] sm:$0xff]
        %v595 = vld [vmem:[%s544 + $0x190] sm:$0xff]
        %v596 = vld [vmem:[%s544 + $0x198] sm:$0xff]
        %v597 = vld [vmem:[%s544 + $0x1a0] sm:$0xff]
        %v598 = vld [vmem:[%s544 + $0x1a8] sm:$0xff]
        %v599 = vld [vmem:[%s544 + $0x1b0] sm:$0xf]
        %v600 = vld [vmem:[%s544 + $0x1b8] sm:$0xf]
        %vm601 = vcmask 1045504
        %v602 = vrot.slane %v230, 2
        %v603 = vrot.slane %v232, 2
        %v604 = vsel %vm601, %v602, %v603
        %v605 = vrot.slane %v231, 2
        %v606 = vrot.slane %v233, 2
        %v607 = vsel %vm601, %v605, %v606
        %v608 = vrot.slane %v234, 2
        %v609 = vsel %vm601, %v603, %v608
        %v610 = vrot.slane %v235, 2
        %v611 = vsel %vm601, %v606, %v610
        %v614 = vsel %vm368, %v607, 0
        %v616 = vsel %vm368, %v611, 0
        %v619 = vsel %vm373, %v599, 0
        %v622 = vsel %vm373, %v600, 0
        %624 = vmatprep.subr.mxu0 %v546
        %625 = vmatpush1.msra.mxu0 %v545
        %626 = vmatprep.subr.mxu0 %v548
        %627 = vmatpush1.msra.mxu0 %v547
        %628 = vmatprep.subr.mxu0 %v550
        %629 = vmatpush1.msra.mxu0 %v549
        %630 = vmatprep.subr.mxu0 %v552
        %631 = vmatpush1.msra.mxu0 %v551
        %632 = vmatprep.subr.mxu0 %v554
        %633 = vmatpush1.msra.mxu0 %v553
        %634 = vmatprep.subr.mxu0 %v556
        %635 = vmatpush1.msra.mxu0 %v555
        %636 = vmatprep.subr.mxu0 %v558
        %637 = vmatpush1.msra.mxu0 %v557
        %638 = vmatprep.subr.mxu0 %v560
        %639 = vmatpush1.msra.mxu0 %v559
        %640 = vmatprep.subr.mxu0 %v562
        %641 = vmatpush1.msra.mxu0 %v561
        %642 = vmatprep.subr.mxu0 %v564
        %643 = vmatpush1.msra.mxu0 %v563
        %644 = vmatprep.subr.mxu0 %v566
        %645 = vmatpush1.msra.mxu0 %v565
        %646 = vmatprep.subr.mxu0 %v568
        %647 = vmatpush1.msra.mxu0 %v567
        %648 = vmatprep.subr.mxu0 %v570
        %649 = vmatpush1.msra.mxu0 %v569
        %650 = vmatprep.subr.mxu0 %v572
        %651 = vmatpush1.msra.mxu0 %v571
        %652 = vmatprep.subr.mxu0 %v574
        %653 = vmatpush1.msra.mxu0 %v573
        %654 = vmatprep.subr.mxu0 %v576
        %655 = vmatpush1.msra.mxu0 %v575
        %656 = vmatprep.subr.mxu0 %v578
        %657 = vmatpush1.msra.mxu0 %v577
        %658 = vmatprep.subr.mxu0 %v580
        %659 = vmatpush1.msra.mxu0 %v579
        %660 = vmatprep.subr.mxu0 %v582
        %661 = vmatpush1.msra.mxu0 %v581
        %662 = vmatprep.subr.mxu0 %v584
        %663 = vmatpush1.msra.mxu0 %v583
        %664 = vmatprep.subr.mxu0 %v586
        %665 = vmatpush1.msra.mxu0 %v585
        %666 = vmatprep.subr.mxu0 %v588
        %667 = vmatpush1.msra.mxu0 %v587
        %668 = vmatprep.subr.mxu0 %v590
        %669 = vmatpush1.msra.mxu0 %v589
        %670 = vmatprep.subr.mxu0 %v592
        %671 = vmatpush1.msra.mxu0 %v591
        %672 = vmatprep.subr.mxu0 %v594
        %673 = vmatpush1.msra.mxu0 %v593
        %674 = vmatprep.subr.mxu0 %v596
        %675 = vmatpush1.msra.mxu0 %v595
        %676 = vmatprep.subr.mxu0 %v598
        %677 = vmatpush1.msra.mxu0 %v597
        %678 = vmatprep.subr.mxu0 %v622
        %679 = vmatpush1.msra.mxu0 %v619
        %680 = vmatprep.subr.mxu0 0.0
        %681 = vmatpush1.msra.mxu0 0.0
        %682 = vmatprep.subr.mxu0 0.0
        %683 = vmatpush1.msra.mxu0 0.0
        %684 = vmatprep.subr.mxu0 0.0
        %685 = vmatpush1.msra.mxu0 0.0
        %686 = vmatprep.subr.mxu0 0.0
        %687 = vmatpush1.msra.mxu0 0.0
        %688 = vmatprep.mubr.f32.mxu0 %v614
        %689 = vmatmul.mubr.f32.gmra.mrb[0].mxu0 %v604
        %v690 = vpop.f32.mrb[0].mxu0
        %v691 = vadd.f32 0.0, %v690
        %v692 = vpop.f32.mrb[0].mxu0
        %v693 = vadd.f32 0.0, %v692
        %694 = vmatprep.mubr.f32.mxu0 %v616
        %695 = vmatmul.mubr.f32.gmra.mrb[0].mxu0 %v609
        %v696 = vpop.f32.mrb[0].mxu0
        %v697 = vadd.f32 0.0, %v696
        %v698 = vpop.f32.mrb[0].mxu0
        %v699 = vadd.f32 0.0, %v698
        %700 = vdwg.mxu0
        %v701 = vadd.f32 %v534, %v691
        %v702 = vadd.f32 %v536, %v693
        %v703 = vadd.f32 %v540, %v697
        %v704 = vadd.f32 %v542, %v699
        %s705 = scalar_lea.vmem [#allocation2], 1344
        %v706 = vld [vmem:[%s705] sm:$0xff]
        %v707 = vld [vmem:[%s705 + $0x8] sm:$0xff]
        %v708 = vld [vmem:[%s705 + $0x10] sm:$0xff]
        %v709 = vld [vmem:[%s705 + $0x18] sm:$0xff]
        %v710 = vld [vmem:[%s705 + $0x20] sm:$0xff]
        %v711 = vld [vmem:[%s705 + $0x28] sm:$0xff]
        %v712 = vld [vmem:[%s705 + $0x30] sm:$0xff]
        %v713 = vld [vmem:[%s705 + $0x38] sm:$0xff]
        %v714 = vld [vmem:[%s705 + $0x40] sm:$0xff]
        %v715 = vld [vmem:[%s705 + $0x48] sm:$0xff]
        %v716 = vld [vmem:[%s705 + $0x50] sm:$0xff]
        %v717 = vld [vmem:[%s705 + $0x58] sm:$0xff]
        %v718 = vld [vmem:[%s705 + $0x60] sm:$0xff]
        %v719 = vld [vmem:[%s705 + $0x68] sm:$0xff]
        %v720 = vld [vmem:[%s705 + $0x70] sm:$0xff]
        %v721 = vld [vmem:[%s705 + $0x78] sm:$0xff]
        %v722 = vld [vmem:[%s705 + $0x80] sm:$0xff]
        %v723 = vld [vmem:[%s705 + $0x88] sm:$0xff]
        %v724 = vld [vmem:[%s705 + $0x90] sm:$0xff]
        %v725 = vld [vmem:[%s705 + $0x98] sm:$0xff]
        %v726 = vld [vmem:[%s705 + $0xa0] sm:$0xff]
        %v727 = vld [vmem:[%s705 + $0xa8] sm:$0xff]
        %v728 = vld [vmem:[%s705 + $0xb0] sm:$0xff]
        %v729 = vld [vmem:[%s705 + $0xb8] sm:$0xff]
        %v730 = vld [vmem:[%s705 + $0xc0] sm:$0xff]
        %v731 = vld [vmem:[%s705 + $0xc8] sm:$0xff]
        %v732 = vld [vmem:[%s705 + $0xd0] sm:$0xff]
        %v733 = vld [vmem:[%s705 + $0xd8] sm:$0xff]
        %v734 = vld [vmem:[%s705 + $0xe0] sm:$0xff]
        %v735 = vld [vmem:[%s705 + $0xe8] sm:$0xff]
        %v736 = vld [vmem:[%s705 + $0xf0] sm:$0xff]
        %v737 = vld [vmem:[%s705 + $0xf8] sm:$0xff]
        %v738 = vld [vmem:[%s705 + $0x100] sm:$0xff]
        %v739 = vld [vmem:[%s705 + $0x108] sm:$0xff]
        %v740 = vld [vmem:[%s705 + $0x110] sm:$0xff]
        %v741 = vld [vmem:[%s705 + $0x118] sm:$0xff]
        %v742 = vld [vmem:[%s705 + $0x120] sm:$0xff]
        %v743 = vld [vmem:[%s705 + $0x128] sm:$0xff]
        %v744 = vld [vmem:[%s705 + $0x130] sm:$0xff]
        %v745 = vld [vmem:[%s705 + $0x138] sm:$0xff]
        %v746 = vld [vmem:[%s705 + $0x140] sm:$0xff]
        %v747 = vld [vmem:[%s705 + $0x148] sm:$0xff]
        %v748 = vld [vmem:[%s705 + $0x150] sm:$0xff]
        %v749 = vld [vmem:[%s705 + $0x158] sm:$0xff]
        %v750 = vld [vmem:[%s705 + $0x160] sm:$0xff]
        %v751 = vld [vmem:[%s705 + $0x168] sm:$0xff]
        %v752 = vld [vmem:[%s705 + $0x170] sm:$0xff]
        %v753 = vld [vmem:[%s705 + $0x178] sm:$0xff]
        %v754 = vld [vmem:[%s705 + $0x180] sm:$0xff]
        %v755 = vld [vmem:[%s705 + $0x188] sm:$0xff]
        %v756 = vld [vmem:[%s705 + $0x190] sm:$0xff]
        %v757 = vld [vmem:[%s705 + $0x198] sm:$0xff]
        %v758 = vld [vmem:[%s705 + $0x1a0] sm:$0xff]
        %v759 = vld [vmem:[%s705 + $0x1a8] sm:$0xff]
        %v760 = vld [vmem:[%s705 + $0x1b0] sm:$0xf]
        %v761 = vld [vmem:[%s705 + $0x1b8] sm:$0xf]
        %vm762 = vcmask 1044480
        %v763 = vrot.slane %v230, 3
        %v764 = vrot.slane %v232, 3
        %v765 = vsel %vm762, %v763, %v764
        %v766 = vrot.slane %v231, 3
        %v767 = vrot.slane %v233, 3
        %v768 = vsel %vm762, %v766, %v767
        %v769 = vrot.slane %v234, 3
        %v770 = vsel %vm762, %v764, %v769
        %v771 = vrot.slane %v235, 3
        %v772 = vsel %vm762, %v767, %v771
        %v775 = vsel %vm368, %v768, 0
        %v777 = vsel %vm368, %v772, 0
        %v780 = vsel %vm373, %v760, 0
        %v783 = vsel %vm373, %v761, 0
        %785 = vmatprep.subr.mxu0 %v707
        %786 = vmatpush1.msra.mxu0 %v706
        %787 = vmatprep.subr.mxu0 %v709
        %788 = vmatpush1.msra.mxu0 %v708
        %789 = vmatprep.subr.mxu0 %v711
        %790 = vmatpush1.msra.mxu0 %v710
        %791 = vmatprep.subr.mxu0 %v713
        %792 = vmatpush1.msra.mxu0 %v712
        %793 = vmatprep.subr.mxu0 %v715
        %794 = vmatpush1.msra.mxu0 %v714
        %795 = vmatprep.subr.mxu0 %v717
        %796 = vmatpush1.msra.mxu0 %v716
        %797 = vmatprep.subr.mxu0 %v719
        %798 = vmatpush1.msra.mxu0 %v718
        %799 = vmatprep.subr.mxu0 %v721
        %800 = vmatpush1.msra.mxu0 %v720
        %801 = vmatprep.subr.mxu0 %v723
        %802 = vmatpush1.msra.mxu0 %v722
        %803 = vmatprep.subr.mxu0 %v725
        %804 = vmatpush1.msra.mxu0 %v724
        %805 = vmatprep.subr.mxu0 %v727
        %806 = vmatpush1.msra.mxu0 %v726
        %807 = vmatprep.subr.mxu0 %v729
        %808 = vmatpush1.msra.mxu0 %v728
        %809 = vmatprep.subr.mxu0 %v731
        %810 = vmatpush1.msra.mxu0 %v730
        %811 = vmatprep.subr.mxu0 %v733
        %812 = vmatpush1.msra.mxu0 %v732
        %813 = vmatprep.subr.mxu0 %v735
        %814 = vmatpush1.msra.mxu0 %v734
        %815 = vmatprep.subr.mxu0 %v737
        %816 = vmatpush1.msra.mxu0 %v736
        %817 = vmatprep.subr.mxu0 %v739
        %818 = vmatpush1.msra.mxu0 %v738
        %819 = vmatprep.subr.mxu0 %v741
        %820 = vmatpush1.msra.mxu0 %v740
        %821 = vmatprep.subr.mxu0 %v743
        %822 = vmatpush1.msra.mxu0 %v742
        %823 = vmatprep.subr.mxu0 %v745
        %824 = vmatpush1.msra.mxu0 %v744
        %825 = vmatprep.subr.mxu0 %v747
        %826 = vmatpush1.msra.mxu0 %v746
        %827 = vmatprep.subr.mxu0 %v749
        %828 = vmatpush1.msra.mxu0 %v748
        %829 = vmatprep.subr.mxu0 %v751
        %830 = vmatpush1.msra.mxu0 %v750
        %831 = vmatprep.subr.mxu0 %v753
        %832 = vmatpush1.msra.mxu0 %v752
        %833 = vmatprep.subr.mxu0 %v755
        %834 = vmatpush1.msra.mxu0 %v754
        %835 = vmatprep.subr.mxu0 %v757
        %836 = vmatpush1.msra.mxu0 %v756
        %837 = vmatprep.subr.mxu0 %v759
        %838 = vmatpush1.msra.mxu0 %v758
        %839 = vmatprep.subr.mxu0 %v783
        %840 = vmatpush1.msra.mxu0 %v780
        %841 = vmatprep.subr.mxu0 0.0
        %842 = vmatpush1.msra.mxu0 0.0
        %843 = vmatprep.subr.mxu0 0.0
        %844 = vmatpush1.msra.mxu0 0.0
        %845 = vmatprep.subr.mxu0 0.0
        %846 = vmatpush1.msra.mxu0 0.0
        %847 = vmatprep.subr.mxu0 0.0
        %848 = vmatpush1.msra.mxu0 0.0
        %849 = vmatprep.mubr.f32.mxu0 %v775
        %850 = vmatmul.mubr.f32.gmra.mrb[0].mxu0 %v765
        %v851 = vpop.f32.mrb[0].mxu0
        %v852 = vadd.f32 0.0, %v851
        %v853 = vpop.f32.mrb[0].mxu0
        %v854 = vadd.f32 0.0, %v853
        %855 = vmatprep.mubr.f32.mxu0 %v777
        %856 = vmatmul.mubr.f32.gmra.mrb[0].mxu0 %v770
        %v857 = vpop.f32.mrb[0].mxu0
        %v858 = vadd.f32 0.0, %v857
        %v859 = vpop.f32.mrb[0].mxu0
        %v860 = vadd.f32 0.0, %v859
        %861 = vdwg.mxu0
        %v862 = vadd.f32 %v701, %v852
        %v863 = vadd.f32 %v702, %v854
        %v864 = vadd.f32 %v703, %v858
        %v865 = vadd.f32 %v704, %v860
        %s866 = scalar_lea.vmem [#allocation2], 1792
        %v867 = vld [vmem:[%s866] sm:$0xff]
        %v868 = vld [vmem:[%s866 + $0x8] sm:$0xff]
        %v869 = vld [vmem:[%s866 + $0x10] sm:$0xff]
        %v870 = vld [vmem:[%s866 + $0x18] sm:$0xff]
        %v871 = vld [vmem:[%s866 + $0x20] sm:$0xff]
        %v872 = vld [vmem:[%s866 + $0x28] sm:$0xff]
        %v873 = vld [vmem:[%s866 + $0x30] sm:$0xff]
        %v874 = vld [vmem:[%s866 + $0x38] sm:$0xff]
        %v875 = vld [vmem:[%s866 + $0x40] sm:$0xff]
        %v876 = vld [vmem:[%s866 + $0x48] sm:$0xff]
        %v877 = vld [vmem:[%s866 + $0x50] sm:$0xff]
        %v878 = vld [vmem:[%s866 + $0x58] sm:$0xff]
        %v879 = vld [vmem:[%s866 + $0x60] sm:$0xff]
        %v880 = vld [vmem:[%s866 + $0x68] sm:$0xff]
        %v881 = vld [vmem:[%s866 + $0x70] sm:$0xff]
        %v882 = vld [vmem:[%s866 + $0x78] sm:$0xff]
        %v883 = vld [vmem:[%s866 + $0x80] sm:$0xff]
        %v884 = vld [vmem:[%s866 + $0x88] sm:$0xff]
        %v885 = vld [vmem:[%s866 + $0x90] sm:$0xff]
        %v886 = vld [vmem:[%s866 + $0x98] sm:$0xff]
        %v887 = vld [vmem:[%s866 + $0xa0] sm:$0xff]
        %v888 = vld [vmem:[%s866 + $0xa8] sm:$0xff]
        %v889 = vld [vmem:[%s866 + $0xb0] sm:$0xff]
        %v890 = vld [vmem:[%s866 + $0xb8] sm:$0xff]
        %v891 = vld [vmem:[%s866 + $0xc0] sm:$0xff]
        %v892 = vld [vmem:[%s866 + $0xc8] sm:$0xff]
        %v893 = vld [vmem:[%s866 + $0xd0] sm:$0xff]
        %v894 = vld [vmem:[%s866 + $0xd8] sm:$0xff]
        %v895 = vld [vmem:[%s866 + $0xe0] sm:$0xff]
        %v896 = vld [vmem:[%s866 + $0xe8] sm:$0xff]
        %v897 = vld [vmem:[%s866 + $0xf0] sm:$0xff]
        %v898 = vld [vmem:[%s866 + $0xf8] sm:$0xff]
        %v899 = vld [vmem:[%s866 + $0x100] sm:$0xff]
        %v900 = vld [vmem:[%s866 + $0x108] sm:$0xff]
        %v901 = vld [vmem:[%s866 + $0x110] sm:$0xff]
        %v902 = vld [vmem:[%s866 + $0x118] sm:$0xff]
        %v903 = vld [vmem:[%s866 + $0x120] sm:$0xff]
        %v904 = vld [vmem:[%s866 + $0x128] sm:$0xff]
        %v905 = vld [vmem:[%s866 + $0x130] sm:$0xff]
        %v906 = vld [vmem:[%s866 + $0x138] sm:$0xff]
        %v907 = vld [vmem:[%s866 + $0x140] sm:$0xff]
        %v908 = vld [vmem:[%s866 + $0x148] sm:$0xff]
        %v909 = vld [vmem:[%s866 + $0x150] sm:$0xff]
        %v910 = vld [vmem:[%s866 + $0x158] sm:$0xff]
        %v911 = vld [vmem:[%s866 + $0x160] sm:$0xff]
        %v912 = vld [vmem:[%s866 + $0x168] sm:$0xff]
        %v913 = vld [vmem:[%s866 + $0x170] sm:$0xff]
        %v914 = vld [vmem:[%s866 + $0x178] sm:$0xff]
        %v915 = vld [vmem:[%s866 + $0x180] sm:$0xff]
        %v916 = vld [vmem:[%s866 + $0x188] sm:$0xff]
        %v917 = vld [vmem:[%s866 + $0x190] sm:$0xff]
        %v918 = vld [vmem:[%s866 + $0x198] sm:$0xff]
        %v919 = vld [vmem:[%s866 + $0x1a0] sm:$0xff]
        %v920 = vld [vmem:[%s866 + $0x1a8] sm:$0xff]
        %v921 = vld [vmem:[%s866 + $0x1b0] sm:$0xf]
        %v922 = vld [vmem:[%s866 + $0x1b8] sm:$0xf]
        %v923 = vrot.slane %v230, 4
        %v924 = vrot.slane %v232, 4
        %v925 = vsel %vm373, %v923, %v924
        %v926 = vrot.slane %v231, 4
        %v927 = vrot.slane %v233, 4
        %v928 = vsel %vm373, %v926, %v927
        %v929 = vrot.slane %v234, 4
        %v930 = vsel %vm373, %v924, %v929
        %v931 = vrot.slane %v235, 4
        %v932 = vsel %vm373, %v927, %v931
        %v935 = vsel %vm368, %v928, 0
        %v937 = vsel %vm368, %v932, 0
        %v940 = vsel %vm373, %v921, 0
        %v943 = vsel %vm373, %v922, 0
        %945 = vmatprep.subr.mxu0 %v868
        %946 = vmatpush1.msra.mxu0 %v867
        %947 = vmatprep.subr.mxu0 %v870
        %948 = vmatpush1.msra.mxu0 %v869
        %949 = vmatprep.subr.mxu0 %v872
        %950 = vmatpush1.msra.mxu0 %v871
        %951 = vmatprep.subr.mxu0 %v874
        %952 = vmatpush1.msra.mxu0 %v873
        %953 = vmatprep.subr.mxu0 %v876
        %954 = vmatpush1.msra.mxu0 %v875
        %955 = vmatprep.subr.mxu0 %v878
        %956 = vmatpush1.msra.mxu0 %v877
        %957 = vmatprep.subr.mxu0 %v880
        %958 = vmatpush1.msra.mxu0 %v879
        %959 = vmatprep.subr.mxu0 %v882
        %960 = vmatpush1.msra.mxu0 %v881
        %961 = vmatprep.subr.mxu0 %v884
        %962 = vmatpush1.msra.mxu0 %v883
        %963 = vmatprep.subr.mxu0 %v886
        %964 = vmatpush1.msra.mxu0 %v885
        %965 = vmatprep.subr.mxu0 %v888
        %966 = vmatpush1.msra.mxu0 %v887
        %967 = vmatprep.subr.mxu0 %v890
        %968 = vmatpush1.msra.mxu0 %v889
        %969 = vmatprep.subr.mxu0 %v892
        %970 = vmatpush1.msra.mxu0 %v891
        %971 = vmatprep.subr.mxu0 %v894
        %972 = vmatpush1.msra.mxu0 %v893
        %973 = vmatprep.subr.mxu0 %v896
        %974 = vmatpush1.msra.mxu0 %v895
        %975 = vmatprep.subr.mxu0 %v898
        %976 = vmatpush1.msra.mxu0 %v897
        %977 = vmatprep.subr.mxu0 %v900
        %978 = vmatpush1.msra.mxu0 %v899
        %979 = vmatprep.subr.mxu0 %v902
        %980 = vmatpush1.msra.mxu0 %v901
        %981 = vmatprep.subr.mxu0 %v904
        %982 = vmatpush1.msra.mxu0 %v903
        %983 = vmatprep.subr.mxu0 %v906
        %984 = vmatpush1.msra.mxu0 %v905
        %985 = vmatprep.subr.mxu0 %v908
        %986 = vmatpush1.msra.mxu0 %v907
        %987 = vmatprep.subr.mxu0 %v910
        %988 = vmatpush1.msra.mxu0 %v909
        %989 = vmatprep.subr.mxu0 %v912
        %990 = vmatpush1.msra.mxu0 %v911
        %991 = vmatprep.subr.mxu0 %v914
        %992 = vmatpush1.msra.mxu0 %v913
        %993 = vmatprep.subr.mxu0 %v916
        %994 = vmatpush1.msra.mxu0 %v915
        %995 = vmatprep.subr.mxu0 %v918
        %996 = vmatpush1.msra.mxu0 %v917
        %997 = vmatprep.subr.mxu0 %v920
        %998 = vmatpush1.msra.mxu0 %v919
        %999 = vmatprep.subr.mxu0 %v943
        %1000 = vmatpush1.msra.mxu0 %v940
        %1001 = vmatprep.subr.mxu0 0.0
        %1002 = vmatpush1.msra.mxu0 0.0
        %1003 = vmatprep.subr.mxu0 0.0
        %1004 = vmatpush1.msra.mxu0 0.0
        %1005 = vmatprep.subr.mxu0 0.0
        %1006 = vmatpush1.msra.mxu0 0.0
        %1007 = vmatprep.subr.mxu0 0.0
        %1008 = vmatpush1.msra.mxu0 0.0
        %1009 = vmatprep.mubr.f32.mxu0 %v935
        %1010 = vmatmul.mubr.f32.gmra.mrb[0].mxu0 %v925
        %v1011 = vpop.f32.mrb[0].mxu0
        %v1012 = vadd.f32 0.0, %v1011
        %v1013 = vpop.f32.mrb[0].mxu0
        %v1014 = vadd.f32 0.0, %v1013
        %1015 = vmatprep.mubr.f32.mxu0 %v937
        %1016 = vmatmul.mubr.f32.gmra.mrb[0].mxu0 %v930
        %v1017 = vpop.f32.mrb[0].mxu0
        %v1018 = vadd.f32 0.0, %v1017
        %v1019 = vpop.f32.mrb[0].mxu0
        %v1020 = vadd.f32 0.0, %v1019
        %1021 = vdwg.mxu0
        %v1022 = vadd.f32 %v862, %v1012
        %v1023 = vadd.f32 %v863, %v1014
        %v1024 = vadd.f32 %v864, %v1018
        %v1025 = vadd.f32 %v865, %v1020
        %v1026 = vld [vmem:[#allocation4] sm:$0x3]
        %v1028 = vlaneseq
        %v1029 = vshrl.u32 %v1028, 7
        %v1030 = vsub.s32 0, %v1029
        %v1031 = vrot.slane %v1026, %v1030
        %v1032 = vlaneseq
        %v1033 = vshrl.u32 %v1032, 7
        %v1034 = vsub.s32 1, %v1033
        %v1035 = vrot.slane %v1026, %v1034
        %v1038 = vadd.f32 %v1022, %v1031
        %v1039 = vadd.f32 %v1023, %v1035
        %v1040 = vadd.f32 %v1024, %v1031
        %v1041 = vadd.f32 %v1025, %v1035
        %1042 = vst [vmem:[%s222] sm:$0xff] %v1038
        %1043 = vst [vmem:[%s222 + $0x8] sm:$0xff] %v1039
        %1044 = vst [vmem:[%s222 + $0x10] sm:$0xff] %v1040
        %1045 = vst [vmem:[%s222 + $0x18] sm:$0xff] %v1041
        %s1046 = smul.u32 2, %s21
        %p1047 = scmp.lt.s32.totalorder %s20, 1
        %s1048 = scalar_select %p1047, %s20, 1
        %p1049 = scmp.lt.s32.totalorder %s1046, 1
        %s1050 = scalar_select %p1049, %s1046, 1
        %s1051 = smul.addr %s1050, 2
        %s1052 = smul.addr %s1048, 4
        %s1053 = sadd.s32 %s1051, %s1052
        %s1054 = smul.addr %s1053, 8
        %s1055 = scalar_lea.vmem %s3, %s1054
        // Predicated region
        $region41: #{conv2d_same.1} parent=31 // pred_check
          %p1056 = pneg %p116
        $region42: #{conv2d_same.1} parent=31 // pred_check_branch
          %1058 = sbr.rel (%p1056) target = $region44
        $region43: #{conv2d_same.1} parent=31 // pred_region
          %s1059 = smul.u32 2, %s21
        $region44: #{conv2d_same.1} parent=31 // pred_fallthru
          _
      $region32: #{conv2d_same.1} parent=5 // pred_fallthru
        _
      %p1060 = scmp.le.s32.totalorder 2, %s11
      // Predicated region
      $region45: #{conv2d_same.1} parent=5 // pred_check
        %p1061 = pneg %p1060
      $region46: #{conv2d_same.1} parent=5 // pred_check_branch
        %1063 = sbr.rel (%p1061) target = $region48
      $region47: #{conv2d_same.1} parent=5 // pred_region
        %s1064 = ssub.s32 %s11, 2
        // Predicated region
        $region49: #{conv2d_same.1} parent=47 // pred_check
          %p1065 = pneg %p122
        $region50: #{conv2d_same.1} parent=47 // pred_check_branch
          %1067 = sbr.rel (%p1065) target = $region52
        $region51: #{conv2d_same.1} parent=47 // pred_region
          %s1068 = smul.u32 2, %s23
          %p1069 = scmp.lt.s32.totalorder %s22, 1
          %s1070 = scalar_select %p1069, %s22, 1
          %p1071 = scmp.lt.s32.totalorder %s1068, 1
          %s1072 = scalar_select %p1071, %s1068, 1
          %s1073 = smul.addr %s1072, 2
          %s1074 = smul.addr %s1070, 4
          %s1075 = sadd.s32 %s1073, %s1074
          %s1076 = smul.addr %s1075, 8
          %s1077 = scalar_lea.vmem %s3, %s1076
        $region52: #{conv2d_same.1} parent=47 // pred_fallthru
          _
      $region48: #{conv2d_same.1} parent=5 // pred_fallthru
        _
    $region6: #{conv2d_same.1} parent=1 // loop_footer
      %s15 = sadd.s32 1, %s11
    $region7: #{conv2d_same.1} parent=1 // loop_footer_branch
      %10 = sbr.rel target = $region3
    $region8: #{conv2d_same.1} parent=1 // loop_exit
      _
    %1078 = vsyncpa [#allocation3], 1
    %s1079 = scalar_lea.sflag [#allocation3], 1
    %1080 = vsyncpa %s1079, 1
    %1081 = vsyncpa [#allocation5], 1

</llo_original>
